<compile_context>
chip_gen: v7x
topology: tpu7x:2x2x1
jax: 0.10.0
libtpu: 0.0.40
codegen_flags: <defaults>
</compile_context>

<pallas_src>
import functools

import jax
import jax.numpy as jnp
from jax.experimental import pallas as pl
from jax.experimental.pallas import tpu as pltpu


def _softplus(x):
    # Numerically-stable Softplus (torch.nn.Softplus, beta=1), f32 path.
    return jnp.maximum(x, 0.0) + jnp.log1p(jnp.exp(-jnp.abs(x)))


def sparse_network_kernel(x_ref, w_ref, b_ref, o_ref):
    """x_ref/o_ref: (block_rows, L); w_ref: (4, L, L) block-diag; b_ref: (4, 1, L)."""
    h = x_ref[...].astype(jnp.float32)
    # 4 fused blocks, statically unrolled: h <- softplus(h @ W_bd_i + b_i)
    for i in range(4):
        w = w_ref[i]  # (L, L) bf16 (or f32) block-diagonal fused weight
        z = jnp.dot(h.astype(w.dtype), w, preferred_element_type=jnp.float32)
        h = _softplus(z + b_ref[i].astype(jnp.float32))
    o_ref[...] = h.astype(o_ref.dtype)


def init_params(key, layer_size):
    """Deterministic nn.Linear-style init; masked upper/lower-triangular W [out, in]."""
    d = layer_size
    bound = 1.0 / jnp.sqrt(jnp.float32(d))
    names = ["l1", "u1", "l2", "u2", "l3", "u3", "u4", "l4"]
    params = {}
    keys = jax.random.split(key, 2 * len(names))
    for i, name in enumerate(names):
        w = jax.random.uniform(keys[2 * i], (d, d), jnp.float32, -bound, bound)
        b = jax.random.uniform(keys[2 * i + 1], (d,), jnp.float32, -bound, bound)
        w = jnp.triu(w) if name.startswith("u") else jnp.tril(w)
        params[name] = (w, b)  # nn.Linear layout: W [out, in], b [out]
    return params


def fuse_params(params, weight_dtype=jnp.bfloat16):
    """Fuse each adjacent (no-activation) linear pair: A = A2 @ A1, b = A2 @ b1 + b2."""
    hp = jax.lax.Precision.HIGHEST

    def fuse(first, second):
        a1, b1 = params[first]
        a2, b2 = params[second]
        return jnp.dot(a2, a1, precision=hp), jnp.dot(a2, b1, precision=hp) + b2

    # Forward order: (l1,u1) (l2,u2) (l3,u3) then block 4 is (u4,l4) per the reference.
    blocks = [("l1", "u1"), ("l2", "u2"), ("l3", "u3"), ("u4", "l4")]
    ws, bs = zip(*(fuse(a, b) for a, b in blocks))
    w_fused = jnp.stack(ws).astype(weight_dtype)   # (4, D, D), [out, in]
    b_fused = jnp.stack(bs).astype(jnp.float32)    # (4, D)
    return w_fused, b_fused


def pick_pack(layer_size):
    """How many samples share one 128-wide lane row."""
    return 128 // layer_size if (layer_size <= 128 and 128 % layer_size == 0) else 1


def pack_params(w_fused, b_fused, pack):
    """Block-diagonal expansion so `pack` samples are processed per lane-dense row.

    kron(I_pack, W.T) is exact (0/1 multipliers), so packed and unpacked math agree.
    """
    n, d, _ = w_fused.shape
    eye = jnp.eye(pack, dtype=w_fused.dtype)
    wt = jnp.swapaxes(w_fused, -1, -2)                      # [in, out]
    w_bd = jnp.stack([jnp.kron(eye, wt[i]) for i in range(n)])  # (4, pack*D, pack*D)
    b_bd = jnp.tile(b_fused, (1, pack))[:, None, :]         # (4, 1, pack*D), f32
    return w_bd, b_bd


def _choose_block_rows(rows, target=512):
    """Packed-row tile: big enough to amortize per-step overhead, grid >= 2 when possible."""
    if rows <= 8:
        return rows  # full-extent block (allowed even when not a multiple of 8)
    br = min(target, rows // 2 if rows >= 16 else rows)
    br = max(8, br)
    return ((br + 7) // 8) * 8  # multiple of 8 (sublane tile)


@functools.partial(jax.jit, static_argnames=("block_rows_target",))
def sparse_network_forward(x, w_bd, b_bd, block_rows_target=512):
    B, D = x.shape
    L = w_bd.shape[-1]          # packed lane width = pack * D (128 for D = 32)
    pack = L // D

    rows = -(-B // pack)
    block_rows = _choose_block_rows(rows, block_rows_target)
    rows_padded = -(-rows // block_rows) * block_rows
    b_padded = rows_padded * pack

    if b_padded != B:
        x = jnp.pad(x, ((0, b_padded - B), (0, 0)))
    # Free row-major regroup (no transpose, no extra HBM pass): pack samples per lane row.
    x2 = x.reshape(rows_padded, L)

    act_spec = pl.BlockSpec((block_rows, L), lambda i: (i, 0))
    w_spec = pl.BlockSpec(w_bd.shape, lambda i: (0, 0, 0))   # grid-invariant, fetched once
    b_spec = pl.BlockSpec(b_bd.shape, lambda i: (0, 0, 0))   # grid-invariant, fetched once

    out2 = pl.pallas_call(
        sparse_network_kernel,
        out_shape=jax.ShapeDtypeStruct((rows_padded, L), x.dtype),
        grid_spec=pltpu.PrefetchScalarGridSpec(
            num_scalar_prefetch=0,
            grid=(rows_padded // block_rows,),
            in_specs=[act_spec, w_spec, b_spec],
            out_specs=act_spec,
        ),
        compiler_params=pltpu.CompilerParams(
            dimension_semantics=("parallel",),
        ),
    )(x2, w_bd, b_bd)

    out = out2.reshape(b_padded, D)
    return out[:B] if b_padded != B else out


def reference_fused(x, w_fused, b_fused):
    """Same math as the kernel (4 fused matmuls, bf16 MXU operands, f32 accum) in plain JAX."""
    h = x.astype(jnp.float32)
    for i in range(4):
        w = w_fused[i]
        z = jnp.dot(h.astype(w.dtype), w.T, preferred_element_type=jnp.float32)
        h = _softplus(z + b_fused[i])
    return h.astype(x.dtype)


def reference_unfused(x, params):
    """Faithful to the PyTorch forward: 8 masked f32 linear layers + 4 Softplus."""
    def lin(h, name):
        w, b = params[name]
        return h @ w.T + b

    out = lin(x, "l1"); out = lin(out, "u1"); out = jax.nn.softplus(out)
    out = lin(out, "l2"); out = lin(out, "u2"); out = jax.nn.softplus(out)
    out = lin(out, "l3"); out = lin(out, "u3"); out = jax.nn.softplus(out)
    out = lin(out, "u4"); out = lin(out, "l4"); out = jax.nn.softplus(out)
    return out


if __name__ == "__main__":
    key = jax.random.PRNGKey(0)
    layer_size = 32   # D = 32 -> pack = 4 samples per 128-wide lane row
    batch = 256       # 64 packed rows -> two 32-row tiles -> grid of 2 ("parallel")

    k_params, k_x = jax.random.split(key)
    params = init_params(k_params, layer_size)
    w_fused, b_fused = fuse_params(params, weight_dtype=jnp.bfloat16)
    pack = pick_pack(layer_size)
    w_bd, b_bd = pack_params(w_fused, b_fused, pack)
    x = jax.random.normal(k_x, (batch, layer_size), jnp.float32)

    out = sparse_network_forward(x, w_bd, b_bd)
    out = jax.block_until_ready(out)
    assert out.shape == (batch, layer_size)

    # Primary check: kernel vs identical fused bf16-operand math in plain JAX.
    ref_f = reference_fused(x, w_fused, b_fused)
    assert jnp.allclose(out, ref_f, atol=5e-3, rtol=5e-3), "kernel vs fused JAX reference mismatch"

    # Sanity check vs the unfused f32 PyTorch-order forward.  Bit-exactness is NOT
    # expected: the algebraic pair-fusion reassociates f32 sums and the MXU operands
    # are bf16 (f32 accumulation), so tolerance is relaxed accordingly.
    ref_u = reference_unfused(x, params)
    assert jnp.allclose(out, ref_u, atol=5e-2, rtol=5e-2), "kernel vs unfused reference mismatch"

    print("KERNEL_OK")
</pallas_src>

<mosaic_0001>
module attributes {stable_mosaic.version = 11 : i64} {
  func.func @sparse_network_kernel(%arg0: i32, %arg1: memref<32x128xf32, #tpu.memory_space<vmem>>, %arg2: memref<4x128x128xbf16, #tpu.memory_space<vmem>>, %arg3: memref<4x1x128xf32, #tpu.memory_space<vmem>>, %arg4: memref<32x128xf32, #tpu.memory_space<vmem>>) attributes {dimension_semantics = [#tpu.dimension_semantics<parallel>], iteration_bounds = array<i64: 2>, scalar_prefetch = 0 : i64, scratch_operands = 0 : i64, tpu.core_type = #tpu.core_type<tc>, window_params = [{transform_indices = @transform_0, window_bounds = array<i64: 32, 128>}, {pipeline_mode = #tpu.pipeline_mode<synchronous>, transform_indices = @transform_1, window_bounds = array<i64: 4, 128, 128>}, {pipeline_mode = #tpu.pipeline_mode<synchronous>, transform_indices = @transform_2, window_bounds = array<i64: 4, 1, 128>}, {transform_indices = @transform_3, window_bounds = array<i64: 32, 128>}]} {
    %c0 = arith.constant 0 : index
    %c0_0 = arith.constant 0 : index
    %0 = vector.load %arg1[%c0, %c0_0] : memref<32x128xf32, #tpu.memory_space<vmem>>, vector<32x128xf32>
    %c0_1 = arith.constant 0 : index
    %c0_2 = arith.constant 0 : index
    %c0_3 = arith.constant 0 : index
    %1 = vector.load %arg2[%c0_1, %c0_2, %c0_3] : memref<4x128x128xbf16, #tpu.memory_space<vmem>>, vector<1x128x128xbf16>
    %2 = vector.shape_cast %1 : vector<1x128x128xbf16> to vector<128x128xbf16>
    %3 = arith.truncf %0 : vector<32x128xf32> to vector<32x128xbf16>
    %cst = arith.constant dense<0.000000e+00> : vector<32x128xf32>
    %4 = tpu.matmul %3, %2, %cst {dimension_numbers = #tpu.dot_dimension_numbers<[1], [0], [0], [1], [0, 0, 1, 1], [], []>} : vector<32x128xbf16>, vector<128x128xbf16>, vector<32x128xf32> -> vector<32x128xf32>
    %c0_4 = arith.constant 0 : index
    %c0_5 = arith.constant 0 : index
    %c0_6 = arith.constant 0 : index
    %5 = vector.load %arg3[%c0_4, %c0_5, %c0_6] : memref<4x1x128xf32, #tpu.memory_space<vmem>>, vector<1x1x128xf32>
    %6 = vector.shape_cast %5 : vector<1x1x128xf32> to vector<1x128xf32>
    %7 = vector.broadcast %6 : vector<1x128xf32> to vector<32x128xf32>
    %8 = arith.addf %4, %7 : vector<32x128xf32>
    %cst_7 = arith.constant 0.000000e+00 : f32
    %9 = vector.broadcast %cst_7 : f32 to vector<32x128xf32>
    %10 = arith.maximumf %8, %9 : vector<32x128xf32>
    %11 = math.absf %8 : vector<32x128xf32>
    %cst_8 = arith.constant 0.000000e+00 : f32
    %12 = vector.broadcast %cst_8 : f32 to vector<32x128xf32>
    %13 = arith.subf %12, %11 : vector<32x128xf32>
    %14 = math.exp %13 : vector<32x128xf32>
    %15 = math.log1p %14 : vector<32x128xf32>
    %16 = arith.addf %10, %15 : vector<32x128xf32>
    %c1 = arith.constant 1 : index
    %c0_9 = arith.constant 0 : index
    %c0_10 = arith.constant 0 : index
    %17 = vector.load %arg2[%c1, %c0_9, %c0_10] : memref<4x128x128xbf16, #tpu.memory_space<vmem>>, vector<1x128x128xbf16>
    %18 = vector.shape_cast %17 : vector<1x128x128xbf16> to vector<128x128xbf16>
    %19 = arith.truncf %16 : vector<32x128xf32> to vector<32x128xbf16>
    %cst_11 = arith.constant dense<0.000000e+00> : vector<32x128xf32>
    %20 = tpu.matmul %19, %18, %cst_11 {dimension_numbers = #tpu.dot_dimension_numbers<[1], [0], [0], [1], [0, 0, 1, 1], [], []>} : vector<32x128xbf16>, vector<128x128xbf16>, vector<32x128xf32> -> vector<32x128xf32>
    %c1_12 = arith.constant 1 : index
    %c0_13 = arith.constant 0 : index
    %c0_14 = arith.constant 0 : index
    %21 = vector.load %arg3[%c1_12, %c0_13, %c0_14] : memref<4x1x128xf32, #tpu.memory_space<vmem>>, vector<1x1x128xf32>
    %22 = vector.shape_cast %21 : vector<1x1x128xf32> to vector<1x128xf32>
    %23 = vector.broadcast %22 : vector<1x128xf32> to vector<32x128xf32>
    %24 = arith.addf %20, %23 : vector<32x128xf32>
    %cst_15 = arith.constant 0.000000e+00 : f32
    %25 = vector.broadcast %cst_15 : f32 to vector<32x128xf32>
    %26 = arith.maximumf %24, %25 : vector<32x128xf32>
    %27 = math.absf %24 : vector<32x128xf32>
    %cst_16 = arith.constant 0.000000e+00 : f32
    %28 = vector.broadcast %cst_16 : f32 to vector<32x128xf32>
    %29 = arith.subf %28, %27 : vector<32x128xf32>
    %30 = math.exp %29 : vector<32x128xf32>
    %31 = math.log1p %30 : vector<32x128xf32>
    %32 = arith.addf %26, %31 : vector<32x128xf32>
    %c2 = arith.constant 2 : index
    %c0_17 = arith.constant 0 : index
    %c0_18 = arith.constant 0 : index
    %33 = vector.load %arg2[%c2, %c0_17, %c0_18] : memref<4x128x128xbf16, #tpu.memory_space<vmem>>, vector<1x128x128xbf16>
    %34 = vector.shape_cast %33 : vector<1x128x128xbf16> to vector<128x128xbf16>
    %35 = arith.truncf %32 : vector<32x128xf32> to vector<32x128xbf16>
    %cst_19 = arith.constant dense<0.000000e+00> : vector<32x128xf32>
    %36 = tpu.matmul %35, %34, %cst_19 {dimension_numbers = #tpu.dot_dimension_numbers<[1], [0], [0], [1], [0, 0, 1, 1], [], []>} : vector<32x128xbf16>, vector<128x128xbf16>, vector<32x128xf32> -> vector<32x128xf32>
    %c2_20 = arith.constant 2 : index
    %c0_21 = arith.constant 0 : index
    %c0_22 = arith.constant 0 : index
    %37 = vector.load %arg3[%c2_20, %c0_21, %c0_22] : memref<4x1x128xf32, #tpu.memory_space<vmem>>, vector<1x1x128xf32>
    %38 = vector.shape_cast %37 : vector<1x1x128xf32> to vector<1x128xf32>
    %39 = vector.broadcast %38 : vector<1x128xf32> to vector<32x128xf32>
    %40 = arith.addf %36, %39 : vector<32x128xf32>
    %cst_23 = arith.constant 0.000000e+00 : f32
    %41 = vector.broadcast %cst_23 : f32 to vector<32x128xf32>
    %42 = arith.maximumf %40, %41 : vector<32x128xf32>
    %43 = math.absf %40 : vector<32x128xf32>
    %cst_24 = arith.constant 0.000000e+00 : f32
    %44 = vector.broadcast %cst_24 : f32 to vector<32x128xf32>
    %45 = arith.subf %44, %43 : vector<32x128xf32>
    %46 = math.exp %45 : vector<32x128xf32>
    %47 = math.log1p %46 : vector<32x128xf32>
    %48 = arith.addf %42, %47 : vector<32x128xf32>
    %c3 = arith.constant 3 : index
    %c0_25 = arith.constant 0 : index
    %c0_26 = arith.constant 0 : index
    %49 = vector.load %arg2[%c3, %c0_25, %c0_26] : memref<4x128x128xbf16, #tpu.memory_space<vmem>>, vector<1x128x128xbf16>
    %50 = vector.shape_cast %49 : vector<1x128x128xbf16> to vector<128x128xbf16>
    %51 = arith.truncf %48 : vector<32x128xf32> to vector<32x128xbf16>
    %cst_27 = arith.constant dense<0.000000e+00> : vector<32x128xf32>
    %52 = tpu.matmul %51, %50, %cst_27 {dimension_numbers = #tpu.dot_dimension_numbers<[1], [0], [0], [1], [0, 0, 1, 1], [], []>} : vector<32x128xbf16>, vector<128x128xbf16>, vector<32x128xf32> -> vector<32x128xf32>
    %c3_28 = arith.constant 3 : index
    %c0_29 = arith.constant 0 : index
    %c0_30 = arith.constant 0 : index
    %53 = vector.load %arg3[%c3_28, %c0_29, %c0_30] : memref<4x1x128xf32, #tpu.memory_space<vmem>>, vector<1x1x128xf32>
    %54 = vector.shape_cast %53 : vector<1x1x128xf32> to vector<1x128xf32>
    %55 = vector.broadcast %54 : vector<1x128xf32> to vector<32x128xf32>
    %56 = arith.addf %52, %55 : vector<32x128xf32>
    %cst_31 = arith.constant 0.000000e+00 : f32
    %57 = vector.broadcast %cst_31 : f32 to vector<32x128xf32>
    %58 = arith.maximumf %56, %57 : vector<32x128xf32>
    %59 = math.absf %56 : vector<32x128xf32>
    %cst_32 = arith.constant 0.000000e+00 : f32
    %60 = vector.broadcast %cst_32 : f32 to vector<32x128xf32>
    %61 = arith.subf %60, %59 : vector<32x128xf32>
    %62 = math.exp %61 : vector<32x128xf32>
    %63 = math.log1p %62 : vector<32x128xf32>
    %64 = arith.addf %58, %63 : vector<32x128xf32>
    %c0_33 = arith.constant 0 : index
    %c0_34 = arith.constant 0 : index
    %65 = vector.load %arg4[%c0_33, %c0_34] : memref<32x128xf32, #tpu.memory_space<vmem>>, vector<32x128xf32>
    tpu.vector_store %arg4[%c0_33, %c0_34], %64 {strides = array<i32>} : memref<32x128xf32, #tpu.memory_space<vmem>>, vector<32x128xf32>,
    return
  }
  func.func @transform_0(%arg0: i32) -> (i32, i32) {
    %c0_i32 = arith.constant 0 : i32
    %c0_i32_0 = arith.constant 0 : i32
    return %arg0, %c0_i32 : i32, i32
  }
  func.func @transform_1(%arg0: i32) -> (i32, i32, i32) {
    %c0_i32 = arith.constant 0 : i32
    %c0_i32_0 = arith.constant 0 : i32
    %c0_i32_1 = arith.constant 0 : i32
    %c0_i32_2 = arith.constant 0 : i32
    return %c0_i32, %c0_i32_0, %c0_i32_1 : i32, i32, i32
  }
  func.func @transform_2(%arg0: i32) -> (i32, i32, i32) {
    %c0_i32 = arith.constant 0 : i32
    %c0_i32_0 = arith.constant 0 : i32
    %c0_i32_1 = arith.constant 0 : i32
    %c0_i32_2 = arith.constant 0 : i32
    return %c0_i32, %c0_i32_0, %c0_i32_1 : i32, i32, i32
  }
  func.func @transform_3(%arg0: i32) -> (i32, i32) {
    %c0_i32 = arith.constant 0 : i32
    %c0_i32_0 = arith.constant 0 : i32
    return %arg0, %c0_i32 : i32, i32
  }
}

</mosaic_0001>

<llo_original>
// kernel: sparse_network_forward.1
$region0: #{sparse_network_forward.1}
  #allocation0 [shape = 'u32[]', space=smem, size = 0x4, offset = 0x4, fixed_abs, tag = 'smem constant byte address 0x4 - core index']
  #allocation1 [shape = 'u32[144,128]{1,0:T(1,128)}', space=vmem, size = 0x12000, scoped, tag = 'internal scratch']
  %s0 = inlined_call_operand.vmem [shape: f32[64,128], index: 0, kind: input, shape index: {}]
  %s1 = inlined_call_operand.vmem [shape: bf16[4,128,128], index: 1, kind: input, shape index: {}]
  %s2 = inlined_call_operand.vmem [shape: f32[4,1,128], index: 2, kind: input, shape index: {}]
  %s3 = inlined_call_operand.vmem [shape: f32[64,128], index: 3, kind: output, shape index: {}]
  %s4 = sld [smem:[#allocation0]]
  $region45: #{sparse_network_forward.1} parent=0
    _
  %s6 = ssub.s32 1, %s4
  %s7 = scalar_select 0, %s6, %s4
  loop: start=0, step=1, limit=4
  $region2: #{sparse_network_forward.1} parent=0 // loop_pre_header
    _
  $region3: #{sparse_network_forward.1} parent=0 // loop_header
    %s9 = sphi 0, %s13
    %p10 = scmp.ge.s32.totalorder %s9, 4
    %s19 = sphi 0, %s21
    %s22 = sphi 0, %s19
    %s23 = sphi 0, %s22
    %s39 = sphi 0, %s23
    %s43 = sphi 0, %s43
    %s45 = sphi 0, %s43
    %s46 = sphi 0, %s45
    %s60 = sphi 0, %s46
    %s64 = sphi 0, %s64
    %s66 = sphi 0, %s64
    %s67 = sphi 0, %s66
    %s81 = sphi 0, %s67
    %s87 = sphi 0, %s89
    %s90 = sphi 0, %s87
    %s91 = sphi 0, %s90
    %s107 = sphi 0, %s91
  $region4: #{sparse_network_forward.1} parent=0 // loop_header_branch
    %12 = sbr.rel (%p10) target = $region8
  $region5: #{sparse_network_forward.1} parent=0 // loop_body
    %s14 = ssub.s32 %s9, 1
    %s15 = ssub.s32 %s9, 2
    %s16 = sadd.s32 %s9, 1
    %s17 = ssub.s32 %s9, %s16
    %p18 = scmp.eq.s32.totalorder %s17, 0
    %s20 = sadd.s32 %s19, 1
    %s21 = scalar_select %p18, %s19, %s20
    %p24 = pneg %p18
    %p25 = scmp.eq.s32.totalorder %s9, 1
    %p26 = por %p24, %p25
    %p27 = scmp.ne.s32.totalorder %s19, %s22
    %p28 = scmp.eq.s32.totalorder %s9, 0
    %p29 = por %p27, %p28
    %p30 = scmp.ne.s32.totalorder %s19, %s22
    %p31 = scmp.eq.s32.totalorder %s14, 1
    %p32 = por %p30, %p31
    %p33 = scmp.ne.s32.totalorder %s22, %s23
    %p34 = scmp.eq.s32.totalorder %s14, 0
    %p35 = por %p33, %p34
    %p36 = scmp.ne.s32.totalorder %s22, %s23
    %p37 = scmp.eq.s32.totalorder %s15, 1
    %p38 = por %p36, %p37
    %p40 = scmp.ne.s32.totalorder %s23, %s39
    %p41 = scmp.eq.s32.totalorder %s15, 0
    %p42 = por %p40, %p41
    %s44 = sadd.s32 %s43, 1
    %p47 = scmp.eq.s32.totalorder %s9, 1
    %p48 = scmp.ne.s32.totalorder %s43, %s45
    %p49 = scmp.eq.s32.totalorder %s9, 0
    %p50 = por %p48, %p49
    %p51 = scmp.ne.s32.totalorder %s43, %s45
    %p52 = scmp.eq.s32.totalorder %s14, 1
    %p53 = por %p51, %p52
    %p54 = scmp.ne.s32.totalorder %s45, %s46
    %p55 = scmp.eq.s32.totalorder %s14, 0
    %p56 = por %p54, %p55
    %p57 = scmp.ne.s32.totalorder %s45, %s46
    %p58 = scmp.eq.s32.totalorder %s15, 1
    %p59 = por %p57, %p58
    %p61 = scmp.ne.s32.totalorder %s46, %s60
    %p62 = scmp.eq.s32.totalorder %s15, 0
    %p63 = por %p61, %p62
    %s65 = sadd.s32 %s64, 1
    %p68 = scmp.eq.s32.totalorder %s9, 1
    %p69 = scmp.ne.s32.totalorder %s64, %s66
    %p70 = scmp.eq.s32.totalorder %s9, 0
    %p71 = por %p69, %p70
    %p72 = scmp.ne.s32.totalorder %s64, %s66
    %p73 = scmp.eq.s32.totalorder %s14, 1
    %p74 = por %p72, %p73
    %p75 = scmp.ne.s32.totalorder %s66, %s67
    %p76 = scmp.eq.s32.totalorder %s14, 0
    %p77 = por %p75, %p76
    %p78 = scmp.ne.s32.totalorder %s66, %s67
    %p79 = scmp.eq.s32.totalorder %s15, 1
    %p80 = por %p78, %p79
    %p82 = scmp.ne.s32.totalorder %s67, %s81
    %p83 = scmp.eq.s32.totalorder %s15, 0
    %p84 = por %p82, %p83
    %s85 = ssub.s32 %s9, %s16
    %p86 = scmp.eq.s32.totalorder %s85, 0
    %s88 = sadd.s32 %s87, 1
    %s89 = scalar_select %p86, %s87, %s88
    %p92 = pneg %p86
    %p93 = scmp.eq.s32.totalorder %s9, 1
    %p94 = por %p92, %p93
    %p95 = scmp.ne.s32.totalorder %s87, %s90
    %p96 = scmp.eq.s32.totalorder %s9, 0
    %p97 = por %p95, %p96
    %p98 = scmp.ne.s32.totalorder %s87, %s90
    %p99 = scmp.eq.s32.totalorder %s14, 1
    %p100 = por %p98, %p99
    %p101 = scmp.ne.s32.totalorder %s90, %s91
    %p102 = scmp.eq.s32.totalorder %s14, 0
    %p103 = por %p101, %p102
    %p104 = scmp.ne.s32.totalorder %s90, %s91
    %p105 = scmp.eq.s32.totalorder %s15, 1
    %p106 = por %p104, %p105
    %p108 = scmp.ne.s32.totalorder %s91, %s107
    %p109 = scmp.eq.s32.totalorder %s15, 0
    %p110 = por %p108, %p109
    %p111 = scmp.le.s32.totalorder 1, %s9
    %p112 = scmp.lt.s32.totalorder %s9, 3
    %p113 = pnand %p111, %p112
    %p114 = pneg %p113
    // Predicated region
    $region9: #{sparse_network_forward.1} parent=5 // pred_check
      _
    $region10: #{sparse_network_forward.1} parent=5 // pred_check_branch
      %116 = sbr.rel (%p113) target = $region12
    $region11: #{sparse_network_forward.1} parent=5 // pred_region
      %s117 = ssub.s32 %s9, 1
      // Predicated region
      $region13: #{sparse_network_forward.1} parent=11 // pred_check
        %p118 = pneg %p56
      $region14: #{sparse_network_forward.1} parent=11 // pred_check_branch
        %120 = sbr.rel (%p118) target = $region16
      $region15: #{sparse_network_forward.1} parent=11 // pred_region
        _
      $region16: #{sparse_network_forward.1} parent=11 // pred_fallthru
        _
      // Predicated region
      $region17: #{sparse_network_forward.1} parent=11 // pred_check
        %p121 = pneg %p77
      $region18: #{sparse_network_forward.1} parent=11 // pred_check_branch
        %123 = sbr.rel (%p121) target = $region20
      $region19: #{sparse_network_forward.1} parent=11 // pred_region
        _
      $region20: #{sparse_network_forward.1} parent=11 // pred_fallthru
        _
    $region12: #{sparse_network_forward.1} parent=5 // pred_fallthru
      _
    %p124 = scmp.lt.s32.totalorder %s9, 2
    // Predicated region
    $region21: #{sparse_network_forward.1} parent=5 // pred_check
      %p125 = pneg %p124
    $region22: #{sparse_network_forward.1} parent=5 // pred_check_branch
      %127 = sbr.rel (%p125) target = $region24
    $region23: #{sparse_network_forward.1} parent=5 // pred_region
      // Predicated region
      $region25: #{sparse_network_forward.1} parent=23 // pred_check
        %p128 = pneg %p29
      $region26: #{sparse_network_forward.1} parent=23 // pred_check_branch
        %130 = sbr.rel (%p128) target = $region28
      $region27: #{sparse_network_forward.1} parent=23 // pred_region
        %s131 = smul.u32 4, %s9
        %p132 = scmp.lt.s32.totalorder %s131, 7
        %s133 = scalar_select %p132, %s131, 7
        %s134 = smul.addr %s133, 8
        %s135 = scalar_lea.vmem %s0, %s134
        %s136 = smul.u32 4, %s9
      $region28: #{sparse_network_forward.1} parent=23 // pred_fallthru
        _
    $region24: #{sparse_network_forward.1} parent=5 // pred_fallthru
      _
    %p137 = scmp.le.s32.totalorder 1, %s9
    %p138 = scmp.lt.s32.totalorder %s9, 3
    %p139 = pnand %p137, %p138
    %p140 = pneg %p139
    // Predicated region
    $region29: #{sparse_network_forward.1} parent=5 // pred_check
      _
    $region30: #{sparse_network_forward.1} parent=5 // pred_check_branch
      %142 = sbr.rel (%p139) target = $region32
    $region31: #{sparse_network_forward.1} parent=5 // pred_region
      %s143 = ssub.s32 %s9, 1
      %s144 = smul.u32 4, %s14
      %p145 = scmp.lt.s32.totalorder %s144, 7
      %s146 = scalar_select %p145, %s144, 7
      %s147 = smul.addr %s146, 8
      %s148 = scalar_lea.vmem %s0, %s147
      %p149 = pneg %p35
      %p150 = pneg %p32
      %p151 = pneg %p56
      %p152 = pneg %p53
      %p153 = pneg %p77
      %p154 = pneg %p74
      %p155 = pneg %p103
      %p156 = pneg %p100
      %s157 = smul.u32 4, %s14
      %p158 = scmp.lt.s32.totalorder %s157, 7
      %s159 = scalar_select %p158, %s157, 7
      %s160 = smul.addr %s159, 8
      %s161 = scalar_lea.vmem %s3, %s160
      %s162 = smul.u32 4, %s14
      %p163 = scmp.lt.s32.totalorder %s162, 7
      %s164 = scalar_select %p163, %s162, 7
      %s165 = smul.addr %s164, 8
      %s166 = scalar_lea.vmem %s0, %s165
      %s167 = smul.u32 4, %s14
      %s168 = smul.u32 4, %s14
      %p169 = scmp.lt.s32.totalorder %s168, 7
      %s170 = scalar_select %p169, %s168, 7
      %s171 = smul.addr %s170, 8
      %s172 = scalar_lea.vmem %s3, %s171
      %s173 = smul.u32 4, %s14
      %v175 = vld [vmem:[%s166] sm:$0xff]
      %v176 = vld [vmem:[%s166 + $0x8] sm:$0xff]
      %v177 = vld [vmem:[%s166 + $0x10] sm:$0xff]
      %v178 = vld [vmem:[%s166 + $0x18] sm:$0xff]
      %v179 = vld [vmem:[%s1] sm:$0xf]
      %v180 = vld [vmem:[%s1 + $0x4] sm:$0xf]
      %v181 = vld [vmem:[%s1 + $0x8] sm:$0xf]
      %v182 = vld [vmem:[%s1 + $0xc] sm:$0xf]
      %v183 = vld [vmem:[%s1 + $0x10] sm:$0xf]
      %v184 = vld [vmem:[%s1 + $0x14] sm:$0xf]
      %v185 = vld [vmem:[%s1 + $0x18] sm:$0xf]
      %v186 = vld [vmem:[%s1 + $0x1c] sm:$0xf]
      %v187 = vld [vmem:[%s1 + $0x20] sm:$0xf]
      %v188 = vld [vmem:[%s1 + $0x24] sm:$0xf]
      %v189 = vld [vmem:[%s1 + $0x28] sm:$0xf]
      %v190 = vld [vmem:[%s1 + $0x2c] sm:$0xf]
      %v191 = vld [vmem:[%s1 + $0x30] sm:$0xf]
      %v192 = vld [vmem:[%s1 + $0x34] sm:$0xf]
      %v193 = vld [vmem:[%s1 + $0x38] sm:$0xf]
      %v194 = vld [vmem:[%s1 + $0x3c] sm:$0xf]
      %v195 = vpack.c.bf16 %v176, %v175
      %v196 = vpack.c.bf16 %v178, %v177
      %v197 = vld [vmem:[%s2] sm:$0x1]
      %v199 = vlaneseq
      %v200 = vshrl.u32 %v199, 7
      %v201 = vsub.s32 0, %v200
      %v202 = vrot.slane %v197, %v201
      %v220 = vunpack.c.l.b16 %v179
      %v221 = vunpack.c.l.b16 %v180
      %v222 = vunpack.c.l.b16 %v181
      %v223 = vunpack.c.l.b16 %v182
      %v224 = vunpack.c.l.b16 %v183
      %v225 = vunpack.c.l.b16 %v184
      %v226 = vunpack.c.l.b16 %v185
      %v227 = vunpack.c.l.b16 %v186
      %v228 = vunpack.c.l.b16 %v187
      %v229 = vunpack.c.l.b16 %v188
      %v230 = vunpack.c.l.b16 %v189
      %v231 = vunpack.c.l.b16 %v190
      %v232 = vunpack.c.l.b16 %v191
      %v233 = vunpack.c.l.b16 %v192
      %v234 = vunpack.c.l.b16 %v193
      %v235 = vunpack.c.l.b16 %v194
      %v236 = vpack.c.b16 %v221, %v220
      %v237 = vpack.c.b16 %v223, %v222
      %v238 = vpack.c.b16 %v225, %v224
      %v239 = vpack.c.b16 %v227, %v226
      %v240 = vpack.c.b16 %v229, %v228
      %v241 = vpack.c.b16 %v231, %v230
      %v242 = vpack.c.b16 %v233, %v232
      %v243 = vpack.c.b16 %v235, %v234
      %252 = vmatprep.subr.bf16.mxu0 0
      %253 = vmatpush1.bf16.msra.mxu0 %v236
      %254 = vmatprep.subr.bf16.mxu0 0
      %255 = vmatpush1.bf16.msra.mxu0 %v237
      %256 = vmatprep.subr.bf16.mxu0 0
      %257 = vmatpush1.bf16.msra.mxu0 %v238
      %258 = vmatprep.subr.bf16.mxu0 0
      %259 = vmatpush1.bf16.msra.mxu0 %v239
      %260 = vmatprep.subr.bf16.mxu0 0
      %261 = vmatpush1.bf16.msra.mxu0 %v240
      %262 = vmatprep.subr.bf16.mxu0 0
      %263 = vmatpush1.bf16.msra.mxu0 %v241
      %264 = vmatprep.subr.bf16.mxu0 0
      %265 = vmatpush1.bf16.msra.mxu0 %v242
      %266 = vmatprep.subr.bf16.mxu0 0
      %267 = vmatpush1.bf16.msra.mxu0 %v243
      %268 = vmatprep.subr.bf16.mxu0 0
      %269 = vmatpush1.bf16.msra.mxu0 0
      %270 = vmatprep.subr.bf16.mxu0 0
      %271 = vmatpush1.bf16.msra.mxu0 0
      %272 = vmatprep.subr.bf16.mxu0 0
      %273 = vmatpush1.bf16.msra.mxu0 0
      %274 = vmatprep.subr.bf16.mxu0 0
      %275 = vmatpush1.bf16.msra.mxu0 0
      %276 = vmatprep.subr.bf16.mxu0 0
      %277 = vmatpush1.bf16.msra.mxu0 0
      %278 = vmatprep.subr.bf16.mxu0 0
      %279 = vmatpush1.bf16.msra.mxu0 0
      %280 = vmatprep.subr.bf16.mxu0 0
      %281 = vmatpush1.bf16.msra.mxu0 0
      %282 = vmatprep.subr.bf16.mxu0 0
      %283 = vmatpush1.bf16.msra.mxu0 0
      %284 = vmatprep.mubr.bf16.mxu0 0
      %285 = vmatmul.mubr.bf16.gmra.mrb[0].mxu0 %v195
      %v286 = vpop.f32.mrb[0].mxu0
      %v287 = vadd.f32 %v202, %v286
      %v288 = vpop.f32.mrb[0].mxu0
      %v289 = vpop.f32.mrb[0].mxu0
      %v290 = vadd.f32 %v202, %v289
      %v291 = vpop.f32.mrb[0].mxu0
      %292 = vmatprep.mubr.bf16.mxu0 0
      %293 = vmatmul.mubr.bf16.gmra.mrb[0].mxu0 %v196
      %v294 = vpop.f32.mrb[0].mxu0
      %v295 = vadd.f32 %v202, %v294
      %v296 = vpop.f32.mrb[0].mxu0
      %v297 = vpop.f32.mrb[0].mxu0
      %v298 = vadd.f32 %v202, %v297
      %v299 = vpop.f32.mrb[0].mxu0
      %300 = vdwg.mxu0
      %v301 = vmax.f32 %v287, 0.0
      %v302 = vmax.f32 %v290, 0.0
      %v303 = vmax.f32 %v295, 0.0
      %v304 = vmax.f32 %v298, 0.0
      %v305 = vand.u32 2147483647, %v287
      %v306 = vand.u32 2147483647, %v290
      %v307 = vand.u32 2147483647, %v295
      %v308 = vand.u32 2147483647, %v298
      %v309 = vsub.f32 0.0, %v305
      %v310 = vsub.f32 0.0, %v306
      %v311 = vsub.f32 0.0, %v307
      %v312 = vsub.f32 0.0, %v308
      %v313 = vmul.f32 %v309, 1.442695
      %v314 = vpow.pop %v313
      %v315 = vmul.f32 %v310, 1.442695
      %v316 = vpow.pop %v315
      %v317 = vmul.f32 %v311, 1.442695
      %v318 = vpow.pop %v317
      %v319 = vmul.f32 %v312, 1.442695
      %v320 = vpow.pop %v319
      %v321 = vadd.f32 %v314, 1.0
      %v322 = vlog2.pop %v321
      %v323 = vmul.f32 %v322, 0.6931472
      %v324 = vmul.f32 -0.5, %v314
      %v325 = vadd.f32 %v324, 1.0
      %v326 = vmul.f32 %v325, %v314
      %v327 = vand.u32 2147483647, %v314
      %vm328 = vcmp.lt.f32.partialorder %v327, 0.0004427343
      %v329 = vsel %vm328, %v326, %v323
      %v330 = vadd.f32 %v316, 1.0
      %v331 = vlog2.pop %v330
      %v332 = vmul.f32 %v331, 0.6931472
      %v333 = vmul.f32 -0.5, %v316
      %v334 = vadd.f32 %v333, 1.0
      %v335 = vmul.f32 %v334, %v316
      %v336 = vand.u32 2147483647, %v316
      %vm337 = vcmp.lt.f32.partialorder %v336, 0.0004427343
      %v338 = vsel %vm337, %v335, %v332
      %v339 = vadd.f32 %v318, 1.0
      %v340 = vlog2.pop %v339
      %v341 = vmul.f32 %v340, 0.6931472
      %v342 = vmul.f32 -0.5, %v318
      %v343 = vadd.f32 %v342, 1.0
      %v344 = vmul.f32 %v343, %v318
      %v345 = vand.u32 2147483647, %v318
      %vm346 = vcmp.lt.f32.partialorder %v345, 0.0004427343
      %v347 = vsel %vm346, %v344, %v341
      %v348 = vadd.f32 %v320, 1.0
      %v349 = vlog2.pop %v348
      %v350 = vmul.f32 %v349, 0.6931472
      %v351 = vmul.f32 -0.5, %v320
      %v352 = vadd.f32 %v351, 1.0
      %v353 = vmul.f32 %v352, %v320
      %v354 = vand.u32 2147483647, %v320
      %vm355 = vcmp.lt.f32.partialorder %v354, 0.0004427343
      %v356 = vsel %vm355, %v353, %v350
      %v357 = vadd.f32 %v301, %v329
      %v358 = vadd.f32 %v302, %v338
      %v359 = vadd.f32 %v303, %v347
      %v360 = vadd.f32 %v304, %v356
      %s361 = scalar_lea.vmem %s1, 64
      %v362 = vld [vmem:[%s361] sm:$0xf]
      %v363 = vld [vmem:[%s361 + $0x4] sm:$0xf]
      %v364 = vld [vmem:[%s361 + $0x8] sm:$0xf]
      %v365 = vld [vmem:[%s361 + $0xc] sm:$0xf]
      %v366 = vld [vmem:[%s361 + $0x10] sm:$0xf]
      %v367 = vld [vmem:[%s361 + $0x14] sm:$0xf]
      %v368 = vld [vmem:[%s361 + $0x18] sm:$0xf]
      %v369 = vld [vmem:[%s361 + $0x1c] sm:$0xf]
      %v370 = vld [vmem:[%s361 + $0x20] sm:$0xf]
      %v371 = vld [vmem:[%s361 + $0x24] sm:$0xf]
      %v372 = vld [vmem:[%s361 + $0x28] sm:$0xf]
      %v373 = vld [vmem:[%s361 + $0x2c] sm:$0xf]
      %v374 = vld [vmem:[%s361 + $0x30] sm:$0xf]
      %v375 = vld [vmem:[%s361 + $0x34] sm:$0xf]
      %v376 = vld [vmem:[%s361 + $0x38] sm:$0xf]
      %v377 = vld [vmem:[%s361 + $0x3c] sm:$0xf]
      %v378 = vpack.c.bf16 %v358, %v357
      %v379 = vpack.c.bf16 %v360, %v359
      %s380 = scalar_lea.vmem %s2, 1
      %v381 = vld [vmem:[%s380] sm:$0x1]
      %v383 = vlaneseq
      %v384 = vshrl.u32 %v383, 7
      %v385 = vsub.s32 0, %v384
      %v386 = vrot.slane %v381, %v385
      %v404 = vunpack.c.l.b16 %v362
      %v405 = vunpack.c.l.b16 %v363
      %v406 = vunpack.c.l.b16 %v364
      %v407 = vunpack.c.l.b16 %v365
      %v408 = vunpack.c.l.b16 %v366
      %v409 = vunpack.c.l.b16 %v367
      %v410 = vunpack.c.l.b16 %v368
      %v411 = vunpack.c.l.b16 %v369
      %v412 = vunpack.c.l.b16 %v370
      %v413 = vunpack.c.l.b16 %v371
      %v414 = vunpack.c.l.b16 %v372
      %v415 = vunpack.c.l.b16 %v373
      %v416 = vunpack.c.l.b16 %v374
      %v417 = vunpack.c.l.b16 %v375
      %v418 = vunpack.c.l.b16 %v376
      %v419 = vunpack.c.l.b16 %v377
      %v420 = vpack.c.b16 %v405, %v404
      %v421 = vpack.c.b16 %v407, %v406
      %v422 = vpack.c.b16 %v409, %v408
      %v423 = vpack.c.b16 %v411, %v410
      %v424 = vpack.c.b16 %v413, %v412
      %v425 = vpack.c.b16 %v415, %v414
      %v426 = vpack.c.b16 %v417, %v416
      %v427 = vpack.c.b16 %v419, %v418
      %436 = vmatprep.subr.bf16.mxu0 0
      %437 = vmatpush1.bf16.msra.mxu0 %v420
      %438 = vmatprep.subr.bf16.mxu0 0
      %439 = vmatpush1.bf16.msra.mxu0 %v421
      %440 = vmatprep.subr.bf16.mxu0 0
      %441 = vmatpush1.bf16.msra.mxu0 %v422
      %442 = vmatprep.subr.bf16.mxu0 0
      %443 = vmatpush1.bf16.msra.mxu0 %v423
      %444 = vmatprep.subr.bf16.mxu0 0
      %445 = vmatpush1.bf16.msra.mxu0 %v424
      %446 = vmatprep.subr.bf16.mxu0 0
      %447 = vmatpush1.bf16.msra.mxu0 %v425
      %448 = vmatprep.subr.bf16.mxu0 0
      %449 = vmatpush1.bf16.msra.mxu0 %v426
      %450 = vmatprep.subr.bf16.mxu0 0
      %451 = vmatpush1.bf16.msra.mxu0 %v427
      %452 = vmatprep.subr.bf16.mxu0 0
      %453 = vmatpush1.bf16.msra.mxu0 0
      %454 = vmatprep.subr.bf16.mxu0 0
      %455 = vmatpush1.bf16.msra.mxu0 0
      %456 = vmatprep.subr.bf16.mxu0 0
      %457 = vmatpush1.bf16.msra.mxu0 0
      %458 = vmatprep.subr.bf16.mxu0 0
      %459 = vmatpush1.bf16.msra.mxu0 0
      %460 = vmatprep.subr.bf16.mxu0 0
      %461 = vmatpush1.bf16.msra.mxu0 0
      %462 = vmatprep.subr.bf16.mxu0 0
      %463 = vmatpush1.bf16.msra.mxu0 0
      %464 = vmatprep.subr.bf16.mxu0 0
      %465 = vmatpush1.bf16.msra.mxu0 0
      %466 = vmatprep.subr.bf16.mxu0 0
      %467 = vmatpush1.bf16.msra.mxu0 0
      %468 = vmatprep.mubr.bf16.mxu0 0
      %469 = vmatmul.mubr.bf16.gmra.mrb[0].mxu0 %v378
      %v470 = vpop.f32.mrb[0].mxu0
      %v471 = vadd.f32 %v386, %v470
      %v472 = vpop.f32.mrb[0].mxu0
      %v473 = vpop.f32.mrb[0].mxu0
      %v474 = vadd.f32 %v386, %v473
      %v475 = vpop.f32.mrb[0].mxu0
      %476 = vmatprep.mubr.bf16.mxu0 0
      %477 = vmatmul.mubr.bf16.gmra.mrb[0].mxu0 %v379
      %v478 = vpop.f32.mrb[0].mxu0
      %v479 = vadd.f32 %v386, %v478
      %v480 = vpop.f32.mrb[0].mxu0
      %v481 = vpop.f32.mrb[0].mxu0
      %v482 = vadd.f32 %v386, %v481
      %v483 = vpop.f32.mrb[0].mxu0
      %484 = vdwg.mxu0
      %v485 = vmax.f32 %v471, 0.0
      %v486 = vmax.f32 %v474, 0.0
      %v487 = vmax.f32 %v479, 0.0
      %v488 = vmax.f32 %v482, 0.0
      %v489 = vand.u32 2147483647, %v471
      %v490 = vand.u32 2147483647, %v474
      %v491 = vand.u32 2147483647, %v479
      %v492 = vand.u32 2147483647, %v482
      %v493 = vsub.f32 0.0, %v489
      %v494 = vsub.f32 0.0, %v490
      %v495 = vsub.f32 0.0, %v491
      %v496 = vsub.f32 0.0, %v492
      %v497 = vmul.f32 %v493, 1.442695
      %v498 = vpow.pop %v497
      %v499 = vmul.f32 %v494, 1.442695
      %v500 = vpow.pop %v499
      %v501 = vmul.f32 %v495, 1.442695
      %v502 = vpow.pop %v501
      %v503 = vmul.f32 %v496, 1.442695
      %v504 = vpow.pop %v503
      %v505 = vadd.f32 %v498, 1.0
      %v506 = vlog2.pop %v505
      %v507 = vmul.f32 %v506, 0.6931472
      %v508 = vmul.f32 -0.5, %v498
      %v509 = vadd.f32 %v508, 1.0
      %v510 = vmul.f32 %v509, %v498
      %v511 = vand.u32 2147483647, %v498
      %vm512 = vcmp.lt.f32.partialorder %v511, 0.0004427343
      %v513 = vsel %vm512, %v510, %v507
      %v514 = vadd.f32 %v500, 1.0
      %v515 = vlog2.pop %v514
      %v516 = vmul.f32 %v515, 0.6931472
      %v517 = vmul.f32 -0.5, %v500
      %v518 = vadd.f32 %v517, 1.0
      %v519 = vmul.f32 %v518, %v500
      %v520 = vand.u32 2147483647, %v500
      %vm521 = vcmp.lt.f32.partialorder %v520, 0.0004427343
      %v522 = vsel %vm521, %v519, %v516
      %v523 = vadd.f32 %v502, 1.0
      %v524 = vlog2.pop %v523
      %v525 = vmul.f32 %v524, 0.6931472
      %v526 = vmul.f32 -0.5, %v502
      %v527 = vadd.f32 %v526, 1.0
      %v528 = vmul.f32 %v527, %v502
      %v529 = vand.u32 2147483647, %v502
      %vm530 = vcmp.lt.f32.partialorder %v529, 0.0004427343
      %v531 = vsel %vm530, %v528, %v525
      %v532 = vadd.f32 %v504, 1.0
      %v533 = vlog2.pop %v532
      %v534 = vmul.f32 %v533, 0.6931472
      %v535 = vmul.f32 -0.5, %v504
      %v536 = vadd.f32 %v535, 1.0
      %v537 = vmul.f32 %v536, %v504
      %v538 = vand.u32 2147483647, %v504
      %vm539 = vcmp.lt.f32.partialorder %v538, 0.0004427343
      %v540 = vsel %vm539, %v537, %v534
      %v541 = vadd.f32 %v485, %v513
      %v542 = vadd.f32 %v486, %v522
      %v543 = vadd.f32 %v487, %v531
      %v544 = vadd.f32 %v488, %v540
      %s545 = scalar_lea.vmem %s1, 128
      %v546 = vld [vmem:[%s545] sm:$0xf]
      %v547 = vld [vmem:[%s545 + $0x4] sm:$0xf]
      %v548 = vld [vmem:[%s545 + $0x8] sm:$0xf]
      %v549 = vld [vmem:[%s545 + $0xc] sm:$0xf]
      %v550 = vld [vmem:[%s545 + $0x10] sm:$0xf]
      %v551 = vld [vmem:[%s545 + $0x14] sm:$0xf]
      %v552 = vld [vmem:[%s545 + $0x18] sm:$0xf]
      %v553 = vld [vmem:[%s545 + $0x1c] sm:$0xf]
      %v554 = vld [vmem:[%s545 + $0x20] sm:$0xf]
      %v555 = vld [vmem:[%s545 + $0x24] sm:$0xf]
      %v556 = vld [vmem:[%s545 + $0x28] sm:$0xf]
      %v557 = vld [vmem:[%s545 + $0x2c] sm:$0xf]
      %v558 = vld [vmem:[%s545 + $0x30] sm:$0xf]
      %v559 = vld [vmem:[%s545 + $0x34] sm:$0xf]
      %v560 = vld [vmem:[%s545 + $0x38] sm:$0xf]
      %v561 = vld [vmem:[%s545 + $0x3c] sm:$0xf]
      %v562 = vpack.c.bf16 %v542, %v541
      %v563 = vpack.c.bf16 %v544, %v543
      %s564 = scalar_lea.vmem %s2, 2
      %v565 = vld [vmem:[%s564] sm:$0x1]
      %v567 = vlaneseq
      %v568 = vshrl.u32 %v567, 7
      %v569 = vsub.s32 0, %v568
      %v570 = vrot.slane %v565, %v569
      %v588 = vunpack.c.l.b16 %v546
      %v589 = vunpack.c.l.b16 %v547
      %v590 = vunpack.c.l.b16 %v548
      %v591 = vunpack.c.l.b16 %v549
      %v592 = vunpack.c.l.b16 %v550
      %v593 = vunpack.c.l.b16 %v551
      %v594 = vunpack.c.l.b16 %v552
      %v595 = vunpack.c.l.b16 %v553
      %v596 = vunpack.c.l.b16 %v554
      %v597 = vunpack.c.l.b16 %v555
      %v598 = vunpack.c.l.b16 %v556
      %v599 = vunpack.c.l.b16 %v557
      %v600 = vunpack.c.l.b16 %v558
      %v601 = vunpack.c.l.b16 %v559
      %v602 = vunpack.c.l.b16 %v560
      %v603 = vunpack.c.l.b16 %v561
      %v604 = vpack.c.b16 %v589, %v588
      %v605 = vpack.c.b16 %v591, %v590
      %v606 = vpack.c.b16 %v593, %v592
      %v607 = vpack.c.b16 %v595, %v594
      %v608 = vpack.c.b16 %v597, %v596
      %v609 = vpack.c.b16 %v599, %v598
      %v610 = vpack.c.b16 %v601, %v600
      %v611 = vpack.c.b16 %v603, %v602
      %620 = vmatprep.subr.bf16.mxu0 0
      %621 = vmatpush1.bf16.msra.mxu0 %v604
      %622 = vmatprep.subr.bf16.mxu0 0
      %623 = vmatpush1.bf16.msra.mxu0 %v605
      %624 = vmatprep.subr.bf16.mxu0 0
      %625 = vmatpush1.bf16.msra.mxu0 %v606
      %626 = vmatprep.subr.bf16.mxu0 0
      %627 = vmatpush1.bf16.msra.mxu0 %v607
      %628 = vmatprep.subr.bf16.mxu0 0
      %629 = vmatpush1.bf16.msra.mxu0 %v608
      %630 = vmatprep.subr.bf16.mxu0 0
      %631 = vmatpush1.bf16.msra.mxu0 %v609
      %632 = vmatprep.subr.bf16.mxu0 0
      %633 = vmatpush1.bf16.msra.mxu0 %v610
      %634 = vmatprep.subr.bf16.mxu0 0
      %635 = vmatpush1.bf16.msra.mxu0 %v611
      %636 = vmatprep.subr.bf16.mxu0 0
      %637 = vmatpush1.bf16.msra.mxu0 0
      %638 = vmatprep.subr.bf16.mxu0 0
      %639 = vmatpush1.bf16.msra.mxu0 0
      %640 = vmatprep.subr.bf16.mxu0 0
      %641 = vmatpush1.bf16.msra.mxu0 0
      %642 = vmatprep.subr.bf16.mxu0 0
      %643 = vmatpush1.bf16.msra.mxu0 0
      %644 = vmatprep.subr.bf16.mxu0 0
      %645 = vmatpush1.bf16.msra.mxu0 0
      %646 = vmatprep.subr.bf16.mxu0 0
      %647 = vmatpush1.bf16.msra.mxu0 0
      %648 = vmatprep.subr.bf16.mxu0 0
      %649 = vmatpush1.bf16.msra.mxu0 0
      %650 = vmatprep.subr.bf16.mxu0 0
      %651 = vmatpush1.bf16.msra.mxu0 0
      %652 = vmatprep.mubr.bf16.mxu0 0
      %653 = vmatmul.mubr.bf16.gmra.mrb[0].mxu0 %v562
      %v654 = vpop.f32.mrb[0].mxu0
      %v655 = vadd.f32 %v570, %v654
      %v656 = vpop.f32.mrb[0].mxu0
      %v657 = vpop.f32.mrb[0].mxu0
      %v658 = vadd.f32 %v570, %v657
      %v659 = vpop.f32.mrb[0].mxu0
      %660 = vmatprep.mubr.bf16.mxu0 0
      %661 = vmatmul.mubr.bf16.gmra.mrb[0].mxu0 %v563
      %v662 = vpop.f32.mrb[0].mxu0
      %v663 = vadd.f32 %v570, %v662
      %v664 = vpop.f32.mrb[0].mxu0
      %v665 = vpop.f32.mrb[0].mxu0
      %v666 = vadd.f32 %v570, %v665
      %v667 = vpop.f32.mrb[0].mxu0
      %668 = vdwg.mxu0
      %v669 = vmax.f32 %v655, 0.0
      %v670 = vmax.f32 %v658, 0.0
      %v671 = vmax.f32 %v663, 0.0
      %v672 = vmax.f32 %v666, 0.0
      %v673 = vand.u32 2147483647, %v655
      %v674 = vand.u32 2147483647, %v658
      %v675 = vand.u32 2147483647, %v663
      %v676 = vand.u32 2147483647, %v666
      %v677 = vsub.f32 0.0, %v673
      %v678 = vsub.f32 0.0, %v674
      %v679 = vsub.f32 0.0, %v675
      %v680 = vsub.f32 0.0, %v676
      %v681 = vmul.f32 %v677, 1.442695
      %v682 = vpow.pop %v681
      %v683 = vmul.f32 %v678, 1.442695
      %v684 = vpow.pop %v683
      %v685 = vmul.f32 %v679, 1.442695
      %v686 = vpow.pop %v685
      %v687 = vmul.f32 %v680, 1.442695
      %v688 = vpow.pop %v687
      %v689 = vadd.f32 %v682, 1.0
      %v690 = vlog2.pop %v689
      %v691 = vmul.f32 %v690, 0.6931472
      %v692 = vmul.f32 -0.5, %v682
      %v693 = vadd.f32 %v692, 1.0
      %v694 = vmul.f32 %v693, %v682
      %v695 = vand.u32 2147483647, %v682
      %vm696 = vcmp.lt.f32.partialorder %v695, 0.0004427343
      %v697 = vsel %vm696, %v694, %v691
      %v698 = vadd.f32 %v684, 1.0
      %v699 = vlog2.pop %v698
      %v700 = vmul.f32 %v699, 0.6931472
      %v701 = vmul.f32 -0.5, %v684
      %v702 = vadd.f32 %v701, 1.0
      %v703 = vmul.f32 %v702, %v684
      %v704 = vand.u32 2147483647, %v684
      %vm705 = vcmp.lt.f32.partialorder %v704, 0.0004427343
      %v706 = vsel %vm705, %v703, %v700
      %v707 = vadd.f32 %v686, 1.0
      %v708 = vlog2.pop %v707
      %v709 = vmul.f32 %v708, 0.6931472
      %v710 = vmul.f32 -0.5, %v686
      %v711 = vadd.f32 %v710, 1.0
      %v712 = vmul.f32 %v711, %v686
      %v713 = vand.u32 2147483647, %v686
      %vm714 = vcmp.lt.f32.partialorder %v713, 0.0004427343
      %v715 = vsel %vm714, %v712, %v709
      %v716 = vadd.f32 %v688, 1.0
      %v717 = vlog2.pop %v716
      %v718 = vmul.f32 %v717, 0.6931472
      %v719 = vmul.f32 -0.5, %v688
      %v720 = vadd.f32 %v719, 1.0
      %v721 = vmul.f32 %v720, %v688
      %v722 = vand.u32 2147483647, %v688
      %vm723 = vcmp.lt.f32.partialorder %v722, 0.0004427343
      %v724 = vsel %vm723, %v721, %v718
      %v725 = vadd.f32 %v669, %v697
      %v726 = vadd.f32 %v670, %v706
      %v727 = vadd.f32 %v671, %v715
      %v728 = vadd.f32 %v672, %v724
      %s729 = scalar_lea.vmem %s1, 192
      %v730 = vld [vmem:[%s729] sm:$0xf]
      %v731 = vld [vmem:[%s729 + $0x4] sm:$0xf]
      %v732 = vld [vmem:[%s729 + $0x8] sm:$0xf]
      %v733 = vld [vmem:[%s729 + $0xc] sm:$0xf]
      %v734 = vld [vmem:[%s729 + $0x10] sm:$0xf]
      %v735 = vld [vmem:[%s729 + $0x14] sm:$0xf]
      %v736 = vld [vmem:[%s729 + $0x18] sm:$0xf]
      %v737 = vld [vmem:[%s729 + $0x1c] sm:$0xf]
      %v738 = vld [vmem:[%s729 + $0x20] sm:$0xf]
      %v739 = vld [vmem:[%s729 + $0x24] sm:$0xf]
      %v740 = vld [vmem:[%s729 + $0x28] sm:$0xf]
      %v741 = vld [vmem:[%s729 + $0x2c] sm:$0xf]
      %v742 = vld [vmem:[%s729 + $0x30] sm:$0xf]
      %v743 = vld [vmem:[%s729 + $0x34] sm:$0xf]
      %v744 = vld [vmem:[%s729 + $0x38] sm:$0xf]
      %v745 = vld [vmem:[%s729 + $0x3c] sm:$0xf]
      %v746 = vpack.c.bf16 %v726, %v725
      %v747 = vpack.c.bf16 %v728, %v727
      %s748 = scalar_lea.vmem %s2, 3
      %v749 = vld [vmem:[%s748] sm:$0x1]
      %v751 = vlaneseq
      %v752 = vshrl.u32 %v751, 7
      %v753 = vsub.s32 0, %v752
      %v754 = vrot.slane %v749, %v753
      %v772 = vunpack.c.l.b16 %v730
      %v773 = vunpack.c.l.b16 %v731
      %v774 = vunpack.c.l.b16 %v732
      %v775 = vunpack.c.l.b16 %v733
      %v776 = vunpack.c.l.b16 %v734
      %v777 = vunpack.c.l.b16 %v735
      %v778 = vunpack.c.l.b16 %v736
      %v779 = vunpack.c.l.b16 %v737
      %v780 = vunpack.c.l.b16 %v738
      %v781 = vunpack.c.l.b16 %v739
      %v782 = vunpack.c.l.b16 %v740
      %v783 = vunpack.c.l.b16 %v741
      %v784 = vunpack.c.l.b16 %v742
      %v785 = vunpack.c.l.b16 %v743
      %v786 = vunpack.c.l.b16 %v744
      %v787 = vunpack.c.l.b16 %v745
      %v788 = vpack.c.b16 %v773, %v772
      %v789 = vpack.c.b16 %v775, %v774
      %v790 = vpack.c.b16 %v777, %v776
      %v791 = vpack.c.b16 %v779, %v778
      %v792 = vpack.c.b16 %v781, %v780
      %v793 = vpack.c.b16 %v783, %v782
      %v794 = vpack.c.b16 %v785, %v784
      %v795 = vpack.c.b16 %v787, %v786
      %804 = vmatprep.subr.bf16.mxu0 0
      %805 = vmatpush1.bf16.msra.mxu0 %v788
      %806 = vmatprep.subr.bf16.mxu0 0
      %807 = vmatpush1.bf16.msra.mxu0 %v789
      %808 = vmatprep.subr.bf16.mxu0 0
      %809 = vmatpush1.bf16.msra.mxu0 %v790
      %810 = vmatprep.subr.bf16.mxu0 0
      %811 = vmatpush1.bf16.msra.mxu0 %v791
      %812 = vmatprep.subr.bf16.mxu0 0
      %813 = vmatpush1.bf16.msra.mxu0 %v792
      %814 = vmatprep.subr.bf16.mxu0 0
      %815 = vmatpush1.bf16.msra.mxu0 %v793
      %816 = vmatprep.subr.bf16.mxu0 0
      %817 = vmatpush1.bf16.msra.mxu0 %v794
      %818 = vmatprep.subr.bf16.mxu0 0
      %819 = vmatpush1.bf16.msra.mxu0 %v795
      %820 = vmatprep.subr.bf16.mxu0 0
      %821 = vmatpush1.bf16.msra.mxu0 0
      %822 = vmatprep.subr.bf16.mxu0 0
      %823 = vmatpush1.bf16.msra.mxu0 0
      %824 = vmatprep.subr.bf16.mxu0 0
      %825 = vmatpush1.bf16.msra.mxu0 0
      %826 = vmatprep.subr.bf16.mxu0 0
      %827 = vmatpush1.bf16.msra.mxu0 0
      %828 = vmatprep.subr.bf16.mxu0 0
      %829 = vmatpush1.bf16.msra.mxu0 0
      %830 = vmatprep.subr.bf16.mxu0 0
      %831 = vmatpush1.bf16.msra.mxu0 0
      %832 = vmatprep.subr.bf16.mxu0 0
      %833 = vmatpush1.bf16.msra.mxu0 0
      %834 = vmatprep.subr.bf16.mxu0 0
      %835 = vmatpush1.bf16.msra.mxu0 0
      %836 = vmatprep.mubr.bf16.mxu0 0
      %837 = vmatmul.mubr.bf16.gmra.mrb[0].mxu0 %v746
      %v838 = vpop.f32.mrb[0].mxu0
      %v839 = vadd.f32 %v754, %v838
      %v840 = vpop.f32.mrb[0].mxu0
      %v841 = vpop.f32.mrb[0].mxu0
      %v842 = vadd.f32 %v754, %v841
      %v843 = vpop.f32.mrb[0].mxu0
      %844 = vmatprep.mubr.bf16.mxu0 0
      %845 = vmatmul.mubr.bf16.gmra.mrb[0].mxu0 %v747
      %v846 = vpop.f32.mrb[0].mxu0
      %v847 = vadd.f32 %v754, %v846
      %v848 = vpop.f32.mrb[0].mxu0
      %v849 = vpop.f32.mrb[0].mxu0
      %v850 = vadd.f32 %v754, %v849
      %v851 = vpop.f32.mrb[0].mxu0
      %852 = vdwg.mxu0
      %v853 = vmax.f32 %v839, 0.0
      %v854 = vmax.f32 %v842, 0.0
      %v855 = vmax.f32 %v847, 0.0
      %v856 = vmax.f32 %v850, 0.0
      %v857 = vand.u32 2147483647, %v839
      %v858 = vand.u32 2147483647, %v842
      %v859 = vand.u32 2147483647, %v847
      %v860 = vand.u32 2147483647, %v850
      %v861 = vsub.f32 0.0, %v857
      %v862 = vsub.f32 0.0, %v858
      %v863 = vsub.f32 0.0, %v859
      %v864 = vsub.f32 0.0, %v860
      %v865 = vmul.f32 %v861, 1.442695
      %v866 = vpow.pop %v865
      %v867 = vmul.f32 %v862, 1.442695
      %v868 = vpow.pop %v867
      %v869 = vmul.f32 %v863, 1.442695
      %v870 = vpow.pop %v869
      %v871 = vmul.f32 %v864, 1.442695
      %v872 = vpow.pop %v871
      %v873 = vadd.f32 %v866, 1.0
      %v874 = vlog2.pop %v873
      %v875 = vmul.f32 %v874, 0.6931472
      %v876 = vmul.f32 -0.5, %v866
      %v877 = vadd.f32 %v876, 1.0
      %v878 = vmul.f32 %v877, %v866
      %v879 = vand.u32 2147483647, %v866
      %vm880 = vcmp.lt.f32.partialorder %v879, 0.0004427343
      %v881 = vsel %vm880, %v878, %v875
      %v882 = vadd.f32 %v868, 1.0
      %v883 = vlog2.pop %v882
      %v884 = vmul.f32 %v883, 0.6931472
      %v885 = vmul.f32 -0.5, %v868
      %v886 = vadd.f32 %v885, 1.0
      %v887 = vmul.f32 %v886, %v868
      %v888 = vand.u32 2147483647, %v868
      %vm889 = vcmp.lt.f32.partialorder %v888, 0.0004427343
      %v890 = vsel %vm889, %v887, %v884
      %v891 = vadd.f32 %v870, 1.0
      %v892 = vlog2.pop %v891
      %v893 = vmul.f32 %v892, 0.6931472
      %v894 = vmul.f32 -0.5, %v870
      %v895 = vadd.f32 %v894, 1.0
      %v896 = vmul.f32 %v895, %v870
      %v897 = vand.u32 2147483647, %v870
      %vm898 = vcmp.lt.f32.partialorder %v897, 0.0004427343
      %v899 = vsel %vm898, %v896, %v893
      %v900 = vadd.f32 %v872, 1.0
      %v901 = vlog2.pop %v900
      %v902 = vmul.f32 %v901, 0.6931472
      %v903 = vmul.f32 -0.5, %v872
      %v904 = vadd.f32 %v903, 1.0
      %v905 = vmul.f32 %v904, %v872
      %v906 = vand.u32 2147483647, %v872
      %vm907 = vcmp.lt.f32.partialorder %v906, 0.0004427343
      %v908 = vsel %vm907, %v905, %v902
      %v909 = vadd.f32 %v853, %v881
      %v910 = vadd.f32 %v854, %v890
      %v911 = vadd.f32 %v855, %v899
      %v912 = vadd.f32 %v856, %v908
      %913 = vst [vmem:[%s172] sm:$0xff] %v909
      %914 = vst [vmem:[%s172 + $0x8] sm:$0xff] %v910
      %915 = vst [vmem:[%s172 + $0x10] sm:$0xff] %v911
      %916 = vst [vmem:[%s172 + $0x18] sm:$0xff] %v912
      %s917 = smul.u32 4, %s14
      %p918 = scmp.lt.s32.totalorder %s917, 7
      %s919 = scalar_select %p918, %s917, 7
      %s920 = smul.addr %s919, 8
      %s921 = scalar_lea.vmem %s3, %s920
      // Predicated region
      $region33: #{sparse_network_forward.1} parent=31 // pred_check
        %p922 = pneg %p100
      $region34: #{sparse_network_forward.1} parent=31 // pred_check_branch
        %924 = sbr.rel (%p922) target = $region36
      $region35: #{sparse_network_forward.1} parent=31 // pred_region
        %s925 = smul.u32 4, %s14
      $region36: #{sparse_network_forward.1} parent=31 // pred_fallthru
        _
    $region32: #{sparse_network_forward.1} parent=5 // pred_fallthru
      _
    %p926 = scmp.le.s32.totalorder 2, %s9
    // Predicated region
    $region37: #{sparse_network_forward.1} parent=5 // pred_check
      %p927 = pneg %p926
    $region38: #{sparse_network_forward.1} parent=5 // pred_check_branch
      %929 = sbr.rel (%p927) target = $region40
    $region39: #{sparse_network_forward.1} parent=5 // pred_region
      %s930 = ssub.s32 %s9, 2
      // Predicated region
      $region41: #{sparse_network_forward.1} parent=39 // pred_check
        %p931 = pneg %p106
      $region42: #{sparse_network_forward.1} parent=39 // pred_check_branch
        %933 = sbr.rel (%p931) target = $region44
      $region43: #{sparse_network_forward.1} parent=39 // pred_region
        %s934 = smul.u32 4, %s15
        %p935 = scmp.lt.s32.totalorder %s934, 7
        %s936 = scalar_select %p935, %s934, 7
        %s937 = smul.addr %s936, 8
        %s938 = scalar_lea.vmem %s3, %s937
      $region44: #{sparse_network_forward.1} parent=39 // pred_fallthru
        _
    $region40: #{sparse_network_forward.1} parent=5 // pred_fallthru
      _
  $region6: #{sparse_network_forward.1} parent=0 // loop_footer
    %s13 = sadd.s32 1, %s9
  $region7: #{sparse_network_forward.1} parent=0 // loop_footer_branch
    %8 = sbr.rel target = $region3
  $region8: #{sparse_network_forward.1} parent=0 // loop_exit
    _

</llo_original>
